<compile_context>
chip_gen: v7x
topology: tpu7x:2x2x1
jax: 0.10.0
libtpu: 0.0.40
codegen_flags: <defaults>
</compile_context>

<pallas_src>
import jax
import jax.numpy as jnp
from jax.experimental import pallas as pl
from jax.experimental.pallas import tpu as pltpu


def _attn_proj_kernel(x_ref, w1t_ref, b1_ref, v_ref, c_ref, o_ref):
    # x_ref  : (TM, K)   streamed row tile of the input
    # w1t_ref: (K, TE)   W1^T column slab (resident across row blocks)
    # b1_ref : (1, TE)   bias slab
    # v_ref  : (1, K)    folded gate vector  v = W2 @ W1
    # c_ref  : (1, 1)    folded gate bias    c = b1 . W2 + b2
    # o_ref  : (TM, TE)  output tile
    x = x_ref[...]
    proj = jnp.dot(x, w1t_ref[...], preferred_element_type=jnp.float32)   # MXU, f32 acc
    proj = proj + b1_ref[...].astype(jnp.float32)
    # Dropout: identity at inference (module default p=0.0).
    # TODO(synk): training-mode dropout would need pltpu.prng_seed / prng_random_bits.
    # Folded gate: depends only on x (K-wide reduce over the already-loaded tile),
    # not on the (TM, E) proj, so there is no second pass over proj and the E axis
    # can be tiled independently of the score.
    score = jnp.sum(x.astype(jnp.float32) * v_ref[...].astype(jnp.float32),
                    axis=-1, keepdims=True)                               # (TM, 1)
    gate = jax.nn.sigmoid(score + c_ref[...].astype(jnp.float32))         # EUP
    o_ref[...] = (proj * gate).astype(o_ref.dtype)


def _vmem_budget_bytes():
    """Generation-aware VMEM budget (~65% of capacity): ~83 MiB on v5e/v6e
    (128 MiB physical), ~42 MiB on v7x (64 MiB physical)."""
    try:
        cap = int(pltpu.get_tpu_info().vmem_capacity_bytes)
    except Exception:
        cap = 64 * 1024 * 1024  # conservative (v7x-sized) fallback
    return max(16 * 1024 * 1024, int(cap * 0.65))


def _choose_tiles(n, k, e_full, itemsize, budget):
    """Pick (row tile TM, embed tile TE) under the VMEM budget.

    TE: prefer the whole (128-padded) embed dim; shrink in 128-multiples when the
    resident W1^T slab would eat more than half the budget (big projections / v7x).
    TM: biggest multiple of 8 that fits the remaining budget AND leaves >= 4 row
    blocks (>= 2 for small N) so the pipeline overlaps and megacore can shard.
    """
    def slab_bytes(te):
        # W1^T + b1 slabs, conservatively counted double-buffered even though their
        # index_map is constant along the row axis.
        return 2 * (k * te + te) * itemsize

    te = None
    for c in (e_full, 4096, 2048, 1024, 512, 256, 128):
        if c <= e_full and e_full % c == 0 and slab_bytes(c) <= budget // 2:
            te = c
            break
    if te is None:
        te = 128 if e_full % 128 == 0 else e_full

    remaining = max(budget - slab_bytes(te) - 4 * (k + 1) * itemsize, budget // 4)
    per_row_bytes = 2 * (k + te) * itemsize          # x tile + out tile, double-buffered
    target_blocks = 4 if n >= 32 else (2 if n >= 16 else 1)
    tm = 8
    for c in (1024, 512, 256, 128, 64, 32, 16, 8):
        if c * per_row_bytes <= remaining and pl.cdiv(n, c) >= target_blocks:
            tm = c
            break
    if n < 8:
        tm = n
    return tm, te


@jax.jit
def attention_projection(x, w1, b1, w2, b2):
    """x: (N, in_dim); w1: (embed_dim, in_dim); b1: (embed_dim,);
       w2: (1, embed_dim); b2: (1,)  -- all in PyTorch nn.Linear layout."""
    n, in_dim = x.shape
    embed_dim = w1.shape[0]
    itemsize = x.dtype.itemsize

    # ---- Wrapper-side algebra (one-time, amortized over all N rows) ----
    w1t = w1.T.astype(x.dtype)                                   # (K, E), no in-kernel transpose
    v = (w2 @ w1).reshape(1, in_dim).astype(x.dtype)             # folded gate vector
    c = (jnp.dot(w2.reshape(-1), b1) + b2.reshape(())
         ).reshape(1, 1).astype(jnp.float32)                     # folded gate bias
    b1_2d = b1.reshape(1, embed_dim).astype(x.dtype)

    # Pad E to a multiple of 128 so output stores are lane-dense (unmasked vst).
    e_pad = (-embed_dim) % 128
    e_full = embed_dim + e_pad
    if e_pad:
        w1t = jnp.pad(w1t, ((0, 0), (0, e_pad)))
        b1_2d = jnp.pad(b1_2d, ((0, 0), (0, e_pad)))

    budget = _vmem_budget_bytes()
    tm, te = _choose_tiles(n, in_dim, e_full, itemsize, budget)
    grid_e = e_full // te
    grid_m = pl.cdiv(n, tm)                                      # ragged last row block OK

    cost = pl.CostEstimate(
        flops=2 * n * in_dim * e_full + (2 * n * in_dim + 3 * n * e_full) * grid_e,
        transcendentals=n * grid_e,
        bytes_accessed=(n * in_dim * grid_e + in_dim * e_full + e_full
                        + in_dim + 1 + n * e_full) * itemsize,
    )

    out = pl.pallas_call(
        _attn_proj_kernel,
        out_shape=jax.ShapeDtypeStruct((n, e_full), x.dtype),
        grid_spec=pltpu.PrefetchScalarGridSpec(
            num_scalar_prefetch=0,
            grid=(grid_e, grid_m),                               # E slabs outer, rows inner
            in_specs=[
                pl.BlockSpec((tm, in_dim), lambda e, m: (m, 0)),     # x: streamed rows
                pl.BlockSpec((in_dim, te), lambda e, m: (0, e)),     # W1^T slab: resident per e
                pl.BlockSpec((1, te), lambda e, m: (0, e)),          # b1 slab
                pl.BlockSpec((1, in_dim), lambda e, m: (0, 0)),      # folded gate vector
                pl.BlockSpec((1, 1), lambda e, m: (0, 0)),           # folded gate bias
            ],
            out_specs=pl.BlockSpec((tm, te), lambda e, m: (m, e)),
        ),
        compiler_params=pltpu.CompilerParams(
            dimension_semantics=("parallel", "parallel"),        # megacore-shardable
            vmem_limit_bytes=budget,                             # consistent with tiler
        ),
        cost_estimate=cost,
    )(x, w1t, b1_2d, v, c)

    return out[:, :embed_dim] if e_pad else out


if __name__ == "__main__":
    # Small shapes consistent with the module: N instances of in_dim features
    # projected to embed_dim.  embed_dim is a multiple of 128 (lane-dense stores)
    # and the tile picker yields grid=(1, 4) so the row pipeline and the
    # "parallel" megacore axis are actually exercised.
    N, IN_DIM, EMBED_DIM = 256, 64, 128

    key = jax.random.PRNGKey(0)
    kx, kw1, kb1, kw2, kb2 = jax.random.split(key, 5)

    x = jax.random.normal(kx, (N, IN_DIM), dtype=jnp.float32)
    # Parameters in PyTorch nn.Linear layout: weight (out, in), bias (out,).
    w1 = jax.random.normal(kw1, (EMBED_DIM, IN_DIM), dtype=jnp.float32) * 0.1
    b1 = jax.random.normal(kb1, (EMBED_DIM,), dtype=jnp.float32) * 0.1
    w2 = jax.random.normal(kw2, (1, EMBED_DIM), dtype=jnp.float32) * 0.1
    b2 = jax.random.normal(kb2, (1,), dtype=jnp.float32) * 0.1

    out = jax.block_until_ready(attention_projection(x, w1, b1, w2, b2))

    # Pure-JAX reference: Linear -> dropout(identity) -> sigmoid(attn_fc) gate -> weighted proj.
    proj_ref = x @ w1.T + b1
    score_ref = jax.nn.sigmoid(proj_ref @ w2.T + b2)
    ref = proj_ref * score_ref

    assert out.shape == (N, EMBED_DIM)
    assert jnp.allclose(out, ref, atol=1e-4, rtol=1e-4), "mismatch vs reference"
    print("KERNEL_OK")
</pallas_src>

<mosaic_0001>
module attributes {stable_mosaic.version = 11 : i64} {
  func.func @_attn_proj_kernel(%arg0: i32, %arg1: i32, %arg2: memref<64x64xf32, #tpu.memory_space<vmem>>, %arg3: memref<64x128xf32, #tpu.memory_space<vmem>>, %arg4: memref<1x128xf32, #tpu.memory_space<vmem>>, %arg5: memref<1x64xf32, #tpu.memory_space<vmem>>, %arg6: memref<1x1xf32, #tpu.memory_space<vmem>>, %arg7: memref<64x128xf32, #tpu.memory_space<vmem>>) attributes {dimension_semantics = [#tpu.dimension_semantics<parallel>, #tpu.dimension_semantics<parallel>], iteration_bounds = array<i64: 1, 4>, scalar_prefetch = 0 : i64, scratch_operands = 0 : i64, tpu.core_type = #tpu.core_type<tc>, window_params = [{transform_indices = @transform_0, window_bounds = array<i64: 64, 64>}, {transform_indices = @transform_1, window_bounds = array<i64: 64, 128>}, {transform_indices = @transform_2, window_bounds = array<i64: 1, 128>}, {pipeline_mode = #tpu.pipeline_mode<synchronous>, transform_indices = @transform_3, window_bounds = array<i64: 1, 64>}, {pipeline_mode = #tpu.pipeline_mode<synchronous>, transform_indices = @transform_4, window_bounds = array<i64: 1, 1>}, {transform_indices = @transform_5, window_bounds = array<i64: 64, 128>}]} {
    %c0 = arith.constant 0 : index
    %c0_0 = arith.constant 0 : index
    %0 = vector.load %arg2[%c0, %c0_0] : memref<64x64xf32, #tpu.memory_space<vmem>>, vector<64x64xf32>
    %c0_1 = arith.constant 0 : index
    %c0_2 = arith.constant 0 : index
    %1 = vector.load %arg3[%c0_1, %c0_2] : memref<64x128xf32, #tpu.memory_space<vmem>>, vector<64x128xf32>
    %cst = arith.constant dense<0.000000e+00> : vector<64x128xf32>
    %2 = tpu.matmul %0, %1, %cst {dimension_numbers = #tpu.dot_dimension_numbers<[1], [0], [0], [1], [0, 0, 1, 1], [], []>} : vector<64x64xf32>, vector<64x128xf32>, vector<64x128xf32> -> vector<64x128xf32>
    %c0_3 = arith.constant 0 : index
    %c0_4 = arith.constant 0 : index
    %3 = vector.load %arg4[%c0_3, %c0_4] : memref<1x128xf32, #tpu.memory_space<vmem>>, vector<1x128xf32>
    %4 = vector.broadcast %3 : vector<1x128xf32> to vector<64x128xf32>
    %5 = arith.addf %2, %4 : vector<64x128xf32>
    %c0_5 = arith.constant 0 : index
    %c0_6 = arith.constant 0 : index
    %6 = vector.load %arg5[%c0_5, %c0_6] : memref<1x64xf32, #tpu.memory_space<vmem>>, vector<1x64xf32>
    %7 = vector.broadcast %6 : vector<1x64xf32> to vector<64x64xf32>
    %8 = arith.mulf %0, %7 : vector<64x64xf32>
    %cst_7 = arith.constant dense<0.000000e+00> : vector<64xf32>
    %9 = vector.multi_reduction <add>, %8, %cst_7 [1] : vector<64x64xf32> to vector<64xf32>
    %10 = vector.shape_cast %9 : vector<64xf32> to vector<64x1xf32>
    %c0_8 = arith.constant 0 : index
    %c0_9 = arith.constant 0 : index
    %11 = vector.load %arg6[%c0_8, %c0_9] : memref<1x1xf32, #tpu.memory_space<vmem>>, vector<1x1xf32>
    %12 = vector.broadcast %11 : vector<1x1xf32> to vector<64x1xf32>
    %13 = arith.addf %10, %12 : vector<64x1xf32>
    %14 = arith.negf %13 : vector<64x1xf32>
    %15 = math.exp %14 : vector<64x1xf32>
    %cst_10 = arith.constant 1.000000e+00 : f32
    %16 = vector.broadcast %cst_10 : f32 to vector<64x1xf32>
    %17 = arith.addf %16, %15 : vector<64x1xf32>
    %18 = arith.divf %16, %17 : vector<64x1xf32>
    %19 = vector.broadcast %18 : vector<64x1xf32> to vector<64x128xf32>
    %20 = arith.mulf %5, %19 : vector<64x128xf32>
    %c0_11 = arith.constant 0 : index
    %c0_12 = arith.constant 0 : index
    %21 = vector.load %arg7[%c0_11, %c0_12] : memref<64x128xf32, #tpu.memory_space<vmem>>, vector<64x128xf32>
    tpu.vector_store %arg7[%c0_11, %c0_12], %20 {strides = array<i32>} : memref<64x128xf32, #tpu.memory_space<vmem>>, vector<64x128xf32>,
    return
  }
  func.func @transform_0(%arg0: i32, %arg1: i32) -> (i32, i32) {
    %c0_i32 = arith.constant 0 : i32
    %c0_i32_0 = arith.constant 0 : i32
    return %arg1, %c0_i32 : i32, i32
  }
  func.func @transform_1(%arg0: i32, %arg1: i32) -> (i32, i32) {
    %c0_i32 = arith.constant 0 : i32
    %c0_i32_0 = arith.constant 0 : i32
    return %c0_i32, %arg0 : i32, i32
  }
  func.func @transform_2(%arg0: i32, %arg1: i32) -> (i32, i32) {
    %c0_i32 = arith.constant 0 : i32
    %c0_i32_0 = arith.constant 0 : i32
    return %c0_i32, %arg0 : i32, i32
  }
  func.func @transform_3(%arg0: i32, %arg1: i32) -> (i32, i32) {
    %c0_i32 = arith.constant 0 : i32
    %c0_i32_0 = arith.constant 0 : i32
    %c0_i32_1 = arith.constant 0 : i32
    return %c0_i32, %c0_i32_0 : i32, i32
  }
  func.func @transform_4(%arg0: i32, %arg1: i32) -> (i32, i32) {
    %c0_i32 = arith.constant 0 : i32
    %c0_i32_0 = arith.constant 0 : i32
    %c0_i32_1 = arith.constant 0 : i32
    return %c0_i32, %c0_i32_0 : i32, i32
  }
  func.func @transform_5(%arg0: i32, %arg1: i32) -> (i32, i32) {
    %c0_i32 = arith.constant 0 : i32
    return %arg1, %arg0 : i32, i32
  }
}

</mosaic_0001>

<llo_original>
// kernel: attention_projection.1
$region0: #{attention_projection.1}
  #allocation0 [shape = 'u32[]', space=smem, size = 0x4, offset = 0x4, fixed_abs, tag = 'smem constant byte address 0x4 - core index']
  #allocation1 [shape = 'u32[144,128]{1,0:T(1,128)}', space=vmem, size = 0x12000, scoped, tag = 'internal scratch']
  #allocation2 [shape = 'f32[1,1]{1,0:T(1,128)S(1)}', space=vmem, size = 0x200, scoped, tag = 'scoped memory for attention_projection.1']
  %s0 = inlined_call_operand.vmem [shape: f32[256,64], index: 0, kind: input, shape index: {}]
  %s1 = inlined_call_operand.vmem [shape: f32[64,128], index: 1, kind: input, shape index: {}]
  %s2 = inlined_call_operand.vmem [shape: f32[1,128], index: 2, kind: input, shape index: {}]
  %s3 = inlined_call_operand.vmem [shape: f32[1,64], index: 3, kind: input, shape index: {}]
  %s4 = inlined_call_operand.<no memory space> [shape: f32[1,1], index: 4, kind: input, shape index: {}]
  %s5 = inlined_call_operand.hbm [shape: f32[256,128], index: 5, kind: output, shape index: {}]
  %s6 = sld [smem:[#allocation0]]
  $region53: #{attention_projection.1} parent=0
    _
  %s8 = ssub.s32 1, %s6
  %s9 = scalar_select 0, %s8, %s6
  %v10 = vstv %s4
  %11 = vst [vmem:[#allocation2] sm:$0x1] %v10
  $region1: #{attention_projection.1} parent=0
    #allocation3 [shape = 'u8[65536]{0}', space=vmem, size = 0x10000, scoped, tag = 'output window, operand 0']
    #allocation4 [shape = 's32[2]{0}', space=sflag, size = 0x8, scoped, tag = 'scoped memory for attention_projection.1']
    %12 = vsyncpa [#allocation4], 0
    %s13 = scalar_lea.sflag [#allocation4], 1
    %14 = vsyncpa %s13, 0
    loop: start=0, step=1, limit=6
    $region2: #{attention_projection.1} parent=1 // loop_pre_header
      _
    $region3: #{attention_projection.1} parent=1 // loop_header
      %s16 = sphi 0, %s20
      %p17 = scmp.ge.s32.totalorder %s16, 6
      %s23 = sphi 0, %s35
      %s24 = sphi 0, %s31
      %s25 = sphi 0, %s23
      %s26 = sphi 0, %s24
      %s27 = sphi 0, %s25
      %s28 = sphi 0, %s26
      %s38 = sphi 0, %s40
      %s41 = sphi 0, %s38
      %s42 = sphi 0, %s41
      %s58 = sphi 0, %s42
      %s64 = sphi 0, %s66
      %s67 = sphi 0, %s64
      %s68 = sphi 0, %s67
      %s84 = sphi 0, %s68
      %s90 = sphi 0, %s92
      %s93 = sphi 0, %s90
      %s94 = sphi 0, %s93
      %s110 = sphi 0, %s94
      %s114 = sphi 0, %s114
      %s116 = sphi 0, %s114
      %s117 = sphi 0, %s116
      %s131 = sphi 0, %s117
      %s135 = sphi 0, %s135
      %s137 = sphi 0, %s135
      %s138 = sphi 0, %s137
      %s152 = sphi 0, %s138
      %s160 = sphi 0, %s162
      %s163 = sphi 0, %s160
      %s164 = sphi 0, %s163
      %s180 = sphi 0, %s164
    $region4: #{attention_projection.1} parent=1 // loop_header_branch
      %19 = sbr.rel (%p17) target = $region8
    $region5: #{attention_projection.1} parent=1 // loop_body
      %s21 = ssub.s32 %s16, 1
      %s22 = ssub.s32 %s16, 2
      %s29 = sadd.s32 1, %s24
      %p30 = scmp.ge.s32.totalorder %s29, 4
      %s31 = scalar_select %p30, 0, %s29
      %s32 = sadd.s32 1, %s23
      %s33 = scalar_select %p30, %s32, %s23
      %p34 = scmp.ge.s32.totalorder %s33, 1
      %s35 = scalar_select %p34, 0, %s33
      %s36 = ssub.s32 %s24, %s31
      %p37 = scmp.eq.s32.totalorder %s36, 0
      %s39 = sadd.s32 %s38, 1
      %s40 = scalar_select %p37, %s38, %s39
      %p43 = pneg %p37
      %p44 = scmp.eq.s32.totalorder %s16, 3
      %p45 = por %p43, %p44
      %p46 = scmp.ne.s32.totalorder %s38, %s41
      %p47 = scmp.eq.s32.totalorder %s16, 0
      %p48 = por %p46, %p47
      %p49 = scmp.ne.s32.totalorder %s38, %s41
      %p50 = scmp.eq.s32.totalorder %s21, 3
      %p51 = por %p49, %p50
      %p52 = scmp.ne.s32.totalorder %s41, %s42
      %p53 = scmp.eq.s32.totalorder %s21, 0
      %p54 = por %p52, %p53
      %p55 = scmp.ne.s32.totalorder %s41, %s42
      %p56 = scmp.eq.s32.totalorder %s22, 3
      %p57 = por %p55, %p56
      %p59 = scmp.ne.s32.totalorder %s42, %s58
      %p60 = scmp.eq.s32.totalorder %s22, 0
      %p61 = por %p59, %p60
      %s62 = ssub.s32 %s23, %s35
      %p63 = scmp.eq.s32.totalorder %s62, 0
      %s65 = sadd.s32 %s64, 1
      %s66 = scalar_select %p63, %s64, %s65
      %p69 = pneg %p63
      %p70 = scmp.eq.s32.totalorder %s16, 3
      %p71 = por %p69, %p70
      %p72 = scmp.ne.s32.totalorder %s64, %s67
      %p73 = scmp.eq.s32.totalorder %s16, 0
      %p74 = por %p72, %p73
      %p75 = scmp.ne.s32.totalorder %s64, %s67
      %p76 = scmp.eq.s32.totalorder %s21, 3
      %p77 = por %p75, %p76
      %p78 = scmp.ne.s32.totalorder %s67, %s68
      %p79 = scmp.eq.s32.totalorder %s21, 0
      %p80 = por %p78, %p79
      %p81 = scmp.ne.s32.totalorder %s67, %s68
      %p82 = scmp.eq.s32.totalorder %s22, 3
      %p83 = por %p81, %p82
      %p85 = scmp.ne.s32.totalorder %s68, %s84
      %p86 = scmp.eq.s32.totalorder %s22, 0
      %p87 = por %p85, %p86
      %s88 = ssub.s32 %s23, %s35
      %p89 = scmp.eq.s32.totalorder %s88, 0
      %s91 = sadd.s32 %s90, 1
      %s92 = scalar_select %p89, %s90, %s91
      %p95 = pneg %p89
      %p96 = scmp.eq.s32.totalorder %s16, 3
      %p97 = por %p95, %p96
      %p98 = scmp.ne.s32.totalorder %s90, %s93
      %p99 = scmp.eq.s32.totalorder %s16, 0
      %p100 = por %p98, %p99
      %p101 = scmp.ne.s32.totalorder %s90, %s93
      %p102 = scmp.eq.s32.totalorder %s21, 3
      %p103 = por %p101, %p102
      %p104 = scmp.ne.s32.totalorder %s93, %s94
      %p105 = scmp.eq.s32.totalorder %s21, 0
      %p106 = por %p104, %p105
      %p107 = scmp.ne.s32.totalorder %s93, %s94
      %p108 = scmp.eq.s32.totalorder %s22, 3
      %p109 = por %p107, %p108
      %p111 = scmp.ne.s32.totalorder %s94, %s110
      %p112 = scmp.eq.s32.totalorder %s22, 0
      %p113 = por %p111, %p112
      %s115 = sadd.s32 %s114, 1
      %p118 = scmp.eq.s32.totalorder %s16, 3
      %p119 = scmp.ne.s32.totalorder %s114, %s116
      %p120 = scmp.eq.s32.totalorder %s16, 0
      %p121 = por %p119, %p120
      %p122 = scmp.ne.s32.totalorder %s114, %s116
      %p123 = scmp.eq.s32.totalorder %s21, 3
      %p124 = por %p122, %p123
      %p125 = scmp.ne.s32.totalorder %s116, %s117
      %p126 = scmp.eq.s32.totalorder %s21, 0
      %p127 = por %p125, %p126
      %p128 = scmp.ne.s32.totalorder %s116, %s117
      %p129 = scmp.eq.s32.totalorder %s22, 3
      %p130 = por %p128, %p129
      %p132 = scmp.ne.s32.totalorder %s117, %s131
      %p133 = scmp.eq.s32.totalorder %s22, 0
      %p134 = por %p132, %p133
      %s136 = sadd.s32 %s135, 1
      %p139 = scmp.eq.s32.totalorder %s16, 3
      %p140 = scmp.ne.s32.totalorder %s135, %s137
      %p141 = scmp.eq.s32.totalorder %s16, 0
      %p142 = por %p140, %p141
      %p143 = scmp.ne.s32.totalorder %s135, %s137
      %p144 = scmp.eq.s32.totalorder %s21, 3
      %p145 = por %p143, %p144
      %p146 = scmp.ne.s32.totalorder %s137, %s138
      %p147 = scmp.eq.s32.totalorder %s21, 0
      %p148 = por %p146, %p147
      %p149 = scmp.ne.s32.totalorder %s137, %s138
      %p150 = scmp.eq.s32.totalorder %s22, 3
      %p151 = por %p149, %p150
      %p153 = scmp.ne.s32.totalorder %s138, %s152
      %p154 = scmp.eq.s32.totalorder %s22, 0
      %p155 = por %p153, %p154
      %s156 = ssub.s32 %s24, %s31
      %s157 = ssub.s32 %s23, %s35
      %s158 = sor.u32 %s156, %s157
      %p159 = scmp.eq.s32.totalorder %s158, 0
      %s161 = sadd.s32 %s160, 1
      %s162 = scalar_select %p159, %s160, %s161
      %p165 = pneg %p159
      %p166 = scmp.eq.s32.totalorder %s16, 3
      %p167 = por %p165, %p166
      %p168 = scmp.ne.s32.totalorder %s160, %s163
      %p169 = scmp.eq.s32.totalorder %s16, 0
      %p170 = por %p168, %p169
      %p171 = scmp.ne.s32.totalorder %s160, %s163
      %p172 = scmp.eq.s32.totalorder %s21, 3
      %p173 = por %p171, %p172
      %p174 = scmp.ne.s32.totalorder %s163, %s164
      %p175 = scmp.eq.s32.totalorder %s21, 0
      %p176 = por %p174, %p175
      %p177 = scmp.ne.s32.totalorder %s163, %s164
      %p178 = scmp.eq.s32.totalorder %s22, 3
      %p179 = por %p177, %p178
      %p181 = scmp.ne.s32.totalorder %s164, %s180
      %p182 = scmp.eq.s32.totalorder %s22, 0
      %p183 = por %p181, %p182
      %p184 = scmp.le.s32.totalorder 1, %s16
      %p185 = scmp.lt.s32.totalorder %s16, 5
      %p186 = pnand %p184, %p185
      %p187 = pneg %p186
      // Predicated region
      $region9: #{attention_projection.1} parent=5 // pred_check
        _
      $region10: #{attention_projection.1} parent=5 // pred_check_branch
        %189 = sbr.rel (%p186) target = $region12
      $region11: #{attention_projection.1} parent=5 // pred_region
        %s190 = ssub.s32 %s16, 1
        // Predicated region
        $region13: #{attention_projection.1} parent=11 // pred_check
          %p191 = pneg %p80
        $region14: #{attention_projection.1} parent=11 // pred_check_branch
          %193 = sbr.rel (%p191) target = $region16
        $region15: #{attention_projection.1} parent=11 // pred_region
          %p194 = scmp.lt.s32.totalorder %s25, 0
          %s195 = scalar_select %p194, %s25, 0
          %s196 = smul.addr %s195, 8
          %s197 = scalar_lea.vmem %s1, %s196
        $region16: #{attention_projection.1} parent=11 // pred_fallthru
          _
        // Predicated region
        $region17: #{attention_projection.1} parent=11 // pred_check
          %p198 = pneg %p106
        $region18: #{attention_projection.1} parent=11 // pred_check_branch
          %200 = sbr.rel (%p198) target = $region20
        $region19: #{attention_projection.1} parent=11 // pred_region
          %p201 = scmp.lt.s32.totalorder %s25, 0
          %s202 = scalar_select %p201, %s25, 0
          %s203 = scalar_lea.vmem %s2, %s202
        $region20: #{attention_projection.1} parent=11 // pred_fallthru
          _
        // Predicated region
        $region21: #{attention_projection.1} parent=11 // pred_check
          %p204 = pneg %p127
        $region22: #{attention_projection.1} parent=11 // pred_check_branch
          %206 = sbr.rel (%p204) target = $region24
        $region23: #{attention_projection.1} parent=11 // pred_region
          _
        $region24: #{attention_projection.1} parent=11 // pred_fallthru
          _
        // Predicated region
        $region25: #{attention_projection.1} parent=11 // pred_check
          %p207 = pneg %p148
        $region26: #{attention_projection.1} parent=11 // pred_check_branch
          %209 = sbr.rel (%p207) target = $region28
        $region27: #{attention_projection.1} parent=11 // pred_region
          _
        $region28: #{attention_projection.1} parent=11 // pred_fallthru
          _
      $region12: #{attention_projection.1} parent=5 // pred_fallthru
        _
      %p210 = scmp.lt.s32.totalorder %s16, 4
      // Predicated region
      $region29: #{attention_projection.1} parent=5 // pred_check
        %p211 = pneg %p210
      $region30: #{attention_projection.1} parent=5 // pred_check_branch
        %213 = sbr.rel (%p211) target = $region32
      $region31: #{attention_projection.1} parent=5 // pred_region
        // Predicated region
        $region33: #{attention_projection.1} parent=31 // pred_check
          %p214 = pneg %p48
        $region34: #{attention_projection.1} parent=31 // pred_check_branch
          %216 = sbr.rel (%p214) target = $region36
        $region35: #{attention_projection.1} parent=31 // pred_region
          %s217 = smul.u32 8, %s24
          %p218 = scmp.lt.s32.totalorder %s217, 31
          %s219 = scalar_select %p218, %s217, 31
          %s220 = smul.addr %s219, 8
          %s221 = scalar_lea.vmem %s0, %s220
          %s222 = smul.u32 8, %s24
        $region36: #{attention_projection.1} parent=31 // pred_fallthru
          _
      $region32: #{attention_projection.1} parent=5 // pred_fallthru
        _
      %p223 = scmp.le.s32.totalorder 1, %s16
      %p224 = scmp.lt.s32.totalorder %s16, 5
      %p225 = pnand %p223, %p224
      %p226 = pneg %p225
      // Predicated region
      $region37: #{attention_projection.1} parent=5 // pred_check
        _
      $region38: #{attention_projection.1} parent=5 // pred_check_branch
        %228 = sbr.rel (%p225) target = $region40
      $region39: #{attention_projection.1} parent=5 // pred_region
        %s229 = ssub.s32 %s16, 1
        %s230 = smul.u32 8, %s26
        %p231 = scmp.lt.s32.totalorder %s230, 31
        %s232 = scalar_select %p231, %s230, 31
        %s233 = smul.addr %s232, 8
        %s234 = scalar_lea.vmem %s0, %s233
        %p235 = pneg %p54
        %p236 = pneg %p51
        %p237 = scmp.lt.s32.totalorder %s25, 0
        %s238 = scalar_select %p237, %s25, 0
        %s239 = smul.addr %s238, 8
        %s240 = scalar_lea.vmem %s1, %s239
        %p241 = pneg %p80
        %p242 = pneg %p77
        %p243 = scmp.lt.s32.totalorder %s25, 0
        %s244 = scalar_select %p243, %s25, 0
        %s245 = scalar_lea.vmem %s2, %s244
        %p246 = pneg %p106
        %p247 = pneg %p103
        %p248 = pneg %p127
        %p249 = pneg %p124
        %p250 = pneg %p148
        %p251 = pneg %p145
        %p252 = pneg %p176
        %p253 = pneg %p173
        %s254 = sand.u32 %s163, 1
        %s255 = scalar_lea.sflag [#allocation4], %s254
        %s256 = sand.u32 %s163, 1
        %s257 = smul.addr %s256, 64
        %s258 = scalar_lea.vmem [#allocation3], %s257
        %s259 = smul.u32 8, %s26
        %p260 = scmp.lt.s32.totalorder %s259, 31
        %s261 = scalar_select %p260, %s259, 31
        %s262 = smul.addr %s261, 8
        %s263 = scalar_lea.vmem %s0, %s262
        %s264 = smul.u32 8, %s26
        %p265 = scmp.lt.s32.totalorder %s25, 0
        %s266 = scalar_select %p265, %s25, 0
        %s267 = smul.addr %s266, 8
        %s268 = scalar_lea.vmem %s1, %s267
        %p269 = scmp.lt.s32.totalorder %s25, 0
        %s270 = scalar_select %p269, %s25, 0
        %s271 = scalar_lea.vmem %s2, %s270
        %s272 = smul.u32 8, %s26
        %v273 = vld [vmem:[%s263] sm:$0xff]
        %v274 = vld [vmem:[%s263 + $0x8] sm:$0xff]
        %v275 = vld [vmem:[%s263 + $0x10] sm:$0xff]
        %v276 = vld [vmem:[%s263 + $0x18] sm:$0xff]
        %v277 = vld [vmem:[%s263 + $0x20] sm:$0xff]
        %v278 = vld [vmem:[%s263 + $0x28] sm:$0xff]
        %v279 = vld [vmem:[%s263 + $0x30] sm:$0xff]
        %v280 = vld [vmem:[%s263 + $0x38] sm:$0xff]
        %v281 = vld [vmem:[%s268] sm:$0xff]
        %v282 = vld [vmem:[%s268 + $0x8] sm:$0xff]
        %v283 = vld [vmem:[%s268 + $0x10] sm:$0xff]
        %v284 = vld [vmem:[%s268 + $0x18] sm:$0xff]
        %v285 = vld [vmem:[%s268 + $0x20] sm:$0xff]
        %v286 = vld [vmem:[%s268 + $0x28] sm:$0xff]
        %v287 = vld [vmem:[%s268 + $0x30] sm:$0xff]
        %v288 = vld [vmem:[%s268 + $0x38] sm:$0xff]
        %v289 = vld [vmem:[%s271] sm:$0x1]
        %v291 = vlaneseq
        %v292 = vshrl.u32 %v291, 7
        %v293 = vsub.s32 0, %v292
        %v294 = vrot.slane %v289, %v293
        %vm296 = vcmask 523264
        %v298 = vsel %vm296, %v273, 0
        %v301 = vsel %vm296, %v274, 0
        %v304 = vsel %vm296, %v275, 0
        %v307 = vsel %vm296, %v276, 0
        %v310 = vsel %vm296, %v277, 0
        %v313 = vsel %vm296, %v278, 0
        %v316 = vsel %vm296, %v279, 0
        %v319 = vsel %vm296, %v280, 0
        %321 = vmatprep.subr.mxu0 0.0
        %322 = vmatpush1.msra.mxu0 %v281
        %323 = vmatprep.subr.mxu0 0.0
        %324 = vmatpush1.msra.mxu0 %v282
        %325 = vmatprep.subr.mxu0 0.0
        %326 = vmatpush1.msra.mxu0 %v283
        %327 = vmatprep.subr.mxu0 0.0
        %328 = vmatpush1.msra.mxu0 %v284
        %329 = vmatprep.subr.mxu0 0.0
        %330 = vmatpush1.msra.mxu0 %v285
        %331 = vmatprep.subr.mxu0 0.0
        %332 = vmatpush1.msra.mxu0 %v286
        %333 = vmatprep.subr.mxu0 0.0
        %334 = vmatpush1.msra.mxu0 %v287
        %335 = vmatprep.subr.mxu0 0.0
        %336 = vmatpush1.msra.mxu0 %v288
        %337 = vmatprep.subr.mxu0 0.0
        %338 = vmatpush1.msra.mxu0 0.0
        %339 = vmatprep.subr.mxu0 0.0
        %340 = vmatpush1.msra.mxu0 0.0
        %341 = vmatprep.subr.mxu0 0.0
        %342 = vmatpush1.msra.mxu0 0.0
        %343 = vmatprep.subr.mxu0 0.0
        %344 = vmatpush1.msra.mxu0 0.0
        %345 = vmatprep.subr.mxu0 0.0
        %346 = vmatpush1.msra.mxu0 0.0
        %347 = vmatprep.subr.mxu0 0.0
        %348 = vmatpush1.msra.mxu0 0.0
        %349 = vmatprep.subr.mxu0 0.0
        %350 = vmatpush1.msra.mxu0 0.0
        %351 = vmatprep.subr.mxu0 0.0
        %352 = vmatpush1.msra.mxu0 0.0
        %353 = vmatprep.subr.mxu0 0.0
        %354 = vmatpush1.msra.mxu0 0.0
        %355 = vmatprep.subr.mxu0 0.0
        %356 = vmatpush1.msra.mxu0 0.0
        %357 = vmatprep.subr.mxu0 0.0
        %358 = vmatpush1.msra.mxu0 0.0
        %359 = vmatprep.subr.mxu0 0.0
        %360 = vmatpush1.msra.mxu0 0.0
        %361 = vmatprep.subr.mxu0 0.0
        %362 = vmatpush1.msra.mxu0 0.0
        %363 = vmatprep.subr.mxu0 0.0
        %364 = vmatpush1.msra.mxu0 0.0
        %365 = vmatprep.subr.mxu0 0.0
        %366 = vmatpush1.msra.mxu0 0.0
        %367 = vmatprep.subr.mxu0 0.0
        %368 = vmatpush1.msra.mxu0 0.0
        %369 = vmatprep.subr.mxu0 0.0
        %370 = vmatpush1.msra.mxu0 0.0
        %371 = vmatprep.subr.mxu0 0.0
        %372 = vmatpush1.msra.mxu0 0.0
        %373 = vmatprep.subr.mxu0 0.0
        %374 = vmatpush1.msra.mxu0 0.0
        %375 = vmatprep.subr.mxu0 0.0
        %376 = vmatpush1.msra.mxu0 0.0
        %377 = vmatprep.subr.mxu0 0.0
        %378 = vmatpush1.msra.mxu0 0.0
        %379 = vmatprep.subr.mxu0 0.0
        %380 = vmatpush1.msra.mxu0 0.0
        %381 = vmatprep.subr.mxu0 0.0
        %382 = vmatpush1.msra.mxu0 0.0
        %383 = vmatprep.subr.mxu0 0.0
        %384 = vmatpush1.msra.mxu0 0.0
        %385 = vmatprep.mubr.f32.mxu0 0.0
        %386 = vmatmul.mubr.f32.gmra.mrb[0].mxu0 %v298
        %v387 = vpop.f32.mrb[0].mxu0
        %v388 = vadd.f32 %v294, %v387
        %v389 = vpop.f32.mrb[0].mxu0
        %390 = vmatprep.mubr.f32.mxu0 0.0
        %391 = vmatmul.mubr.f32.gmra.mrb[0].mxu0 %v301
        %v392 = vpop.f32.mrb[0].mxu0
        %v393 = vadd.f32 %v294, %v392
        %v394 = vpop.f32.mrb[0].mxu0
        %395 = vmatprep.mubr.f32.mxu0 0.0
        %396 = vmatmul.mubr.f32.gmra.mrb[0].mxu0 %v304
        %v397 = vpop.f32.mrb[0].mxu0
        %v398 = vadd.f32 %v294, %v397
        %v399 = vpop.f32.mrb[0].mxu0
        %400 = vmatprep.mubr.f32.mxu0 0.0
        %401 = vmatmul.mubr.f32.gmra.mrb[0].mxu0 %v307
        %v402 = vpop.f32.mrb[0].mxu0
        %v403 = vadd.f32 %v294, %v402
        %v404 = vpop.f32.mrb[0].mxu0
        %405 = vmatprep.mubr.f32.mxu0 0.0
        %406 = vmatmul.mubr.f32.gmra.mrb[0].mxu0 %v310
        %v407 = vpop.f32.mrb[0].mxu0
        %v408 = vadd.f32 %v294, %v407
        %v409 = vpop.f32.mrb[0].mxu0
        %410 = vmatprep.mubr.f32.mxu0 0.0
        %411 = vmatmul.mubr.f32.gmra.mrb[0].mxu0 %v313
        %v412 = vpop.f32.mrb[0].mxu0
        %v413 = vadd.f32 %v294, %v412
        %v414 = vpop.f32.mrb[0].mxu0
        %415 = vmatprep.mubr.f32.mxu0 0.0
        %416 = vmatmul.mubr.f32.gmra.mrb[0].mxu0 %v316
        %v417 = vpop.f32.mrb[0].mxu0
        %v418 = vadd.f32 %v294, %v417
        %v419 = vpop.f32.mrb[0].mxu0
        %420 = vmatprep.mubr.f32.mxu0 0.0
        %421 = vmatmul.mubr.f32.gmra.mrb[0].mxu0 %v319
        %v422 = vpop.f32.mrb[0].mxu0
        %v423 = vadd.f32 %v294, %v422
        %v424 = vpop.f32.mrb[0].mxu0
        %425 = vdwg.mxu0
        %v426 = vld [vmem:[%s3] sm:$0x1]
        %v428 = vlaneseq
        %v429 = vshrl.u32 %v428, 7
        %v430 = vsub.s32 0, %v429
        %v431 = vrot.slane %v426, %v430
        %v433 = vmul.f32 %v273, %v431
        %v434 = vmul.f32 %v274, %v431
        %v435 = vmul.f32 %v275, %v431
        %v436 = vmul.f32 %v276, %v431
        %v437 = vmul.f32 %v277, %v431
        %v438 = vmul.f32 %v278, %v431
        %v439 = vmul.f32 %v279, %v431
        %v440 = vmul.f32 %v280, %v431
        %v441 = vsel %vm296, %v433, 0.0
        %442 = vadd.xlane.f32.xlu0 %v441
        %v443 = vpop.xlane.xlu0 %442
        %v444 = vsel %vm296, %v434, 0.0
        %445 = vadd.xlane.f32.xlu0 %v444
        %v446 = vpop.xlane.xlu0 %445
        %v447 = vsel %vm296, %v435, 0.0
        %448 = vadd.xlane.f32.xlu0 %v447
        %v449 = vpop.xlane.xlu0 %448
        %v450 = vsel %vm296, %v436, 0.0
        %451 = vadd.xlane.f32.xlu0 %v450
        %v452 = vpop.xlane.xlu0 %451
        %v453 = vsel %vm296, %v437, 0.0
        %454 = vadd.xlane.f32.xlu0 %v453
        %v455 = vpop.xlane.xlu0 %454
        %v456 = vsel %vm296, %v438, 0.0
        %457 = vadd.xlane.f32.xlu0 %v456
        %v458 = vpop.xlane.xlu0 %457
        %v459 = vsel %vm296, %v439, 0.0
        %460 = vadd.xlane.f32.xlu0 %v459
        %v461 = vpop.xlane.xlu0 %460
        %v462 = vsel %vm296, %v440, 0.0
        %463 = vadd.xlane.f32.xlu0 %v462
        %v464 = vpop.xlane.xlu0 %463
        %v465 = vld [vmem:[#allocation2] sm:$0x1]
        %v467 = vlaneseq
        %v468 = vshrl.u32 %v467, 7
        %v469 = vsub.s32 0, %v468
        %v470 = vrot.slane %v465, %v469
        %v472 = vadd.f32 %v443, %v470
        %v473 = vadd.f32 %v446, %v470
        %v474 = vadd.f32 %v449, %v470
        %v475 = vadd.f32 %v452, %v470
        %v476 = vadd.f32 %v455, %v470
        %v477 = vadd.f32 %v458, %v470
        %v478 = vadd.f32 %v461, %v470
        %v479 = vadd.f32 %v464, %v470
        %v480 = vxor.u32 %v472, 2147483648
        %v481 = vxor.u32 %v473, 2147483648
        %v482 = vxor.u32 %v474, 2147483648
        %v483 = vxor.u32 %v475, 2147483648
        %v484 = vxor.u32 %v476, 2147483648
        %v485 = vxor.u32 %v477, 2147483648
        %v486 = vxor.u32 %v478, 2147483648
        %v487 = vxor.u32 %v479, 2147483648
        %v488 = vmul.f32 %v480, 1.442695
        %v489 = vpow.pop %v488
        %v490 = vmul.f32 %v481, 1.442695
        %v491 = vpow.pop %v490
        %v492 = vmul.f32 %v482, 1.442695
        %v493 = vpow.pop %v492
        %v494 = vmul.f32 %v483, 1.442695
        %v495 = vpow.pop %v494
        %v496 = vmul.f32 %v484, 1.442695
        %v497 = vpow.pop %v496
        %v498 = vmul.f32 %v485, 1.442695
        %v499 = vpow.pop %v498
        %v500 = vmul.f32 %v486, 1.442695
        %v501 = vpow.pop %v500
        %v502 = vmul.f32 %v487, 1.442695
        %v503 = vpow.pop %v502
        %v504 = vadd.f32 %v489, 1.0
        %v505 = vadd.f32 %v491, 1.0
        %v506 = vadd.f32 %v493, 1.0
        %v507 = vadd.f32 %v495, 1.0
        %v508 = vadd.f32 %v497, 1.0
        %v509 = vadd.f32 %v499, 1.0
        %v510 = vadd.f32 %v501, 1.0
        %v511 = vadd.f32 %v503, 1.0
        %v512 = vrcp.pop %v504
        %v513 = vmul.f32 1.0, %v512
        %v514 = vrcp.pop %v505
        %v515 = vmul.f32 1.0, %v514
        %v516 = vrcp.pop %v506
        %v517 = vmul.f32 1.0, %v516
        %v518 = vrcp.pop %v507
        %v519 = vmul.f32 1.0, %v518
        %v520 = vrcp.pop %v508
        %v521 = vmul.f32 1.0, %v520
        %v522 = vrcp.pop %v509
        %v523 = vmul.f32 1.0, %v522
        %v524 = vrcp.pop %v510
        %v525 = vmul.f32 1.0, %v524
        %v526 = vrcp.pop %v511
        %v527 = vmul.f32 1.0, %v526
        %529 = vset.pattern.permute.xlu0 0
        %530 = vperm.xlu0 %529, %v513
        %v531 = vpop.permute.xlu0 %530
        %534 = vset.pattern.permute.xlu0 0
        %535 = vperm.xlu0 %534, %v515
        %v536 = vpop.permute.xlu0 %535
        %539 = vset.pattern.permute.xlu0 0
        %540 = vperm.xlu0 %539, %v517
        %v541 = vpop.permute.xlu0 %540
        %544 = vset.pattern.permute.xlu0 0
        %545 = vperm.xlu0 %544, %v519
        %v546 = vpop.permute.xlu0 %545
        %549 = vset.pattern.permute.xlu0 0
        %550 = vperm.xlu0 %549, %v521
        %v551 = vpop.permute.xlu0 %550
        %554 = vset.pattern.permute.xlu0 0
        %555 = vperm.xlu0 %554, %v523
        %v556 = vpop.permute.xlu0 %555
        %559 = vset.pattern.permute.xlu0 0
        %560 = vperm.xlu0 %559, %v525
        %v561 = vpop.permute.xlu0 %560
        %564 = vset.pattern.permute.xlu0 0
        %565 = vperm.xlu0 %564, %v527
        %v566 = vpop.permute.xlu0 %565
        %v568 = vmul.f32 %v388, %v531
        %v569 = vmul.f32 %v393, %v536
        %v570 = vmul.f32 %v398, %v541
        %v571 = vmul.f32 %v403, %v546
        %v572 = vmul.f32 %v408, %v551
        %v573 = vmul.f32 %v413, %v556
        %v574 = vmul.f32 %v418, %v561
        %v575 = vmul.f32 %v423, %v566
        %576 = vst [vmem:[%s258] sm:$0xff] %v568
        %577 = vst [vmem:[%s258 + $0x8] sm:$0xff] %v569
        %578 = vst [vmem:[%s258 + $0x10] sm:$0xff] %v570
        %579 = vst [vmem:[%s258 + $0x18] sm:$0xff] %v571
        %580 = vst [vmem:[%s258 + $0x20] sm:$0xff] %v572
        %581 = vst [vmem:[%s258 + $0x28] sm:$0xff] %v573
        %582 = vst [vmem:[%s258 + $0x30] sm:$0xff] %v574
        %583 = vst [vmem:[%s258 + $0x38] sm:$0xff] %v575
        %s584 = sand.u32 %s163, 1
        %s585 = scalar_lea.sflag [#allocation4], %s584
        %s586 = sand.u32 %s163, 1
        %s587 = smul.addr %s586, 64
        %s588 = scalar_lea.vmem [#allocation3], %s587
        // Predicated region
        $region41: #{attention_projection.1} parent=39 // pred_check
          %p589 = pneg %p173
        $region42: #{attention_projection.1} parent=39 // pred_check_branch
          %591 = sbr.rel (%p589) target = $region44
        $region43: #{attention_projection.1} parent=39 // pred_region
          %s592 = smul.u32 8, %s26
          %s594 = ssub.s32 1024, 1024
          %595 = vsyncadd %s585, %s594
          %s596 = sadd.s32 %s25, %s592
          %s597 = smul.addr %s596, 128
          %s598 = scalar_lea.hbm %s5, %s597
          %s599 = sshll.u32 %s588, 4
          %s600 = int_to_ptr.vmem [resolvable:$true] %s599
          %605 = dma.vmem_to_hbm [thread:$0]  %s600, 1024, %s598, %s585, 128, 128, 8
        $region44: #{attention_projection.1} parent=39 // pred_fallthru
          _
      $region40: #{attention_projection.1} parent=5 // pred_fallthru
        _
      %p606 = scmp.le.s32.totalorder 2, %s16
      // Predicated region
      $region45: #{attention_projection.1} parent=5 // pred_check
        %p607 = pneg %p606
      $region46: #{attention_projection.1} parent=5 // pred_check_branch
        %609 = sbr.rel (%p607) target = $region48
      $region47: #{attention_projection.1} parent=5 // pred_region
        %s610 = ssub.s32 %s16, 2
        // Predicated region
        $region49: #{attention_projection.1} parent=47 // pred_check
          %p611 = pneg %p179
        $region50: #{attention_projection.1} parent=47 // pred_check_branch
          %613 = sbr.rel (%p611) target = $region52
        $region51: #{attention_projection.1} parent=47 // pred_region
          %s614 = sand.u32 %s164, 1
          %s615 = scalar_lea.sflag [#allocation4], %s614
          %s616 = sand.u32 %s164, 1
          %s617 = smul.addr %s616, 64
          %s618 = scalar_lea.vmem [#allocation3], %s617
          %619 = dma.done %s615, 1024
        $region52: #{attention_projection.1} parent=47 // pred_fallthru
          _
      $region48: #{attention_projection.1} parent=5 // pred_fallthru
        _
    $region6: #{attention_projection.1} parent=1 // loop_footer
      %s20 = sadd.s32 1, %s16
    $region7: #{attention_projection.1} parent=1 // loop_footer_branch
      %15 = sbr.rel target = $region3
    $region8: #{attention_projection.1} parent=1 // loop_exit
      _
    %620 = vsyncpa [#allocation4], 1
    %s621 = scalar_lea.sflag [#allocation4], 1
    %622 = vsyncpa %s621, 1

</llo_original>
